<compile_context>
chip_gen: v7x
topology: tpu7x:2x2x1
jax: 0.10.0
libtpu: 0.0.40
codegen_flags: <defaults>
</compile_context>

<pallas_src>
import functools

import jax
import jax.numpy as jnp
import numpy as np
from jax.experimental import pallas as pl
from jax.experimental.pallas import tpu as pltpu

EPS = 1e-5                      # BatchNorm1d default eps
LANE = 128                      # TPU lane width: channel dims padded to multiples of this
MXU_DTYPE = jnp.bfloat16        # MXU operand / activation-intermediate dtype (f32 acc).
                                # Set to jnp.float32 for the exact f32 PyTorch forward.
VMEM_LIMIT = 48 * 1024 * 1024   # explicit scoped-VMEM budget (fits v7x's 64 MiB VMEM)
TARGET_ROWS = 1024              # rows per grid step (>=256 keeps the MXU/DMA busy)


# --------------------------------------------------------------------------------------
# Kernels
# --------------------------------------------------------------------------------------
def stats1_kernel(x_ref, w1_ref, b1_ref, s_ref, ss_ref):
    """Pass A of fc1: h1 = x @ W1 + b1 for one polygon-group tile; accumulate the global
    BN first/second moments into resident (1, C) outputs.  h1 is NOT written to HBM."""
    b = pl.program_id(0)

    @pl.when(b == 0)
    def _init():
        s_ref[...] = jnp.zeros_like(s_ref)
        ss_ref[...] = jnp.zeros_like(ss_ref)

    h = jnp.dot(x_ref[...], w1_ref[...], preferred_element_type=jnp.float32) + b1_ref[...]
    # TODO(synk): single-pass E[h^2]-E[h]^2 variance can cancel for large-mean
    # activations; a shifted/two-pass formulation would be more robust.
    s_ref[...] += jnp.sum(h, axis=0, keepdims=True)
    ss_ref[...] += jnp.sum(h * h, axis=0, keepdims=True)


def apply1_stats2_kernel(inv_count, n_pts,
                         x_ref, w1a_ref, b1a_ref, s1_ref, ss1_ref, g1_ref, be1_ref,
                         w2a_ref, b2a_ref, w1b_ref, b1b_ref,
                         out1_ref, m1_ref, s2_ref, ss2_ref):
    """Fused: apply fc1 (recompute h1, BN with global stats, ReLU, Linear2) producing
    out1 + per-polygon max m1, then immediately accumulate fc2's BN moments from out1."""
    b = pl.program_id(0)
    rows = x_ref.shape[0]
    grp = rows // n_pts

    h1 = jnp.dot(x_ref[...], w1a_ref[...], preferred_element_type=jnp.float32) + b1a_ref[...]
    mu = s1_ref[...] * inv_count
    var = jnp.maximum(ss1_ref[...] * inv_count - mu * mu, 0.0)   # biased train-mode var
    hn = jnp.maximum((h1 - mu) * jax.lax.rsqrt(var + EPS) * g1_ref[...] + be1_ref[...], 0.0)
    out1 = jnp.dot(hn.astype(MXU_DTYPE), w2a_ref[...],
                   preferred_element_type=jnp.float32) + b2a_ref[...]

    o1m = out1.astype(MXU_DTYPE)
    out1_ref[...] = o1m
    m1_ref[...] = jnp.max(out1.reshape(grp, n_pts, out1.shape[-1]), axis=1)

    @pl.when(b == 0)
    def _init():
        s2_ref[...] = jnp.zeros_like(s2_ref)
        ss2_ref[...] = jnp.zeros_like(ss2_ref)

    h2 = jnp.dot(o1m, w1b_ref[...], preferred_element_type=jnp.float32) + b1b_ref[...]
    s2_ref[...] += jnp.sum(h2, axis=0, keepdims=True)
    ss2_ref[...] += jnp.sum(h2 * h2, axis=0, keepdims=True)


def apply2_stats3_kernel(inv_count, n_pts,
                         out1_ref, w1b_ref, b1b_ref, s2_ref, ss2_ref, g2_ref, be2_ref,
                         w2b_ref, b2b_ref, w3t_ref, w3b_ref, b3_ref,
                         m2_ref, s3_ref, ss3_ref):
    """Fused: apply fc2 (recompute h2, BN, ReLU, Linear2) -> f2, tile-local per-polygon
    max m2, then accumulate fc3's BN moments.  fc3's input concat is folded into split
    weight rows:  cat([out1, repeat(m2)]) @ W1 == out1 @ W_top + repeat(m2) @ W_bot."""
    b = pl.program_id(0)
    out1 = out1_ref[...]                                   # (rows, c1), MXU dtype
    rows = out1.shape[0]
    grp = rows // n_pts

    h2 = jnp.dot(out1, w1b_ref[...], preferred_element_type=jnp.float32) + b1b_ref[...]
    mu = s2_ref[...] * inv_count
    var = jnp.maximum(ss2_ref[...] * inv_count - mu * mu, 0.0)
    hn = jnp.maximum((h2 - mu) * jax.lax.rsqrt(var + EPS) * g2_ref[...] + be2_ref[...], 0.0)
    f2 = jnp.dot(hn.astype(MXU_DTYPE), w2b_ref[...],
                 preferred_element_type=jnp.float32) + b2b_ref[...]

    m2 = jnp.max(f2.reshape(grp, n_pts, f2.shape[-1]), axis=1)    # (grp, c2), f32
    m2_ref[...] = m2

    t = jnp.dot(m2.astype(MXU_DTYPE), w3b_ref[...], preferred_element_type=jnp.float32)
    h3 = jnp.dot(out1, w3t_ref[...], preferred_element_type=jnp.float32) + b3_ref[...]
    h3 = (h3.reshape(grp, n_pts, h3.shape[-1]) + t[:, None, :]).reshape(rows, -1)

    @pl.when(b == 0)
    def _init():
        s3_ref[...] = jnp.zeros_like(s3_ref)
        ss3_ref[...] = jnp.zeros_like(ss3_ref)

    s3_ref[...] += jnp.sum(h3, axis=0, keepdims=True)
    ss3_ref[...] += jnp.sum(h3 * h3, axis=0, keepdims=True)


def apply3_kernel(inv_count, n_pts,
                  out1_ref, m2_ref, w3t_ref, w3b_ref, b3_ref, s3_ref, ss3_ref,
                  g3_ref, be3_ref, w2c_ref, b2c_ref, m3_ref):
    """Apply fc3: recompute h3 from out1 and m2, BN with global stats, ReLU, Linear2,
    and write the per-polygon max m3 as sublane-dense (group, C) blocks."""
    out1 = out1_ref[...]
    m2 = m2_ref[...]
    rows = out1.shape[0]
    grp = rows // n_pts

    t = jnp.dot(m2.astype(MXU_DTYPE), w3b_ref[...], preferred_element_type=jnp.float32)
    h3 = jnp.dot(out1, w3t_ref[...], preferred_element_type=jnp.float32) + b3_ref[...]
    h3 = (h3.reshape(grp, n_pts, h3.shape[-1]) + t[:, None, :]).reshape(rows, -1)

    mu = s3_ref[...] * inv_count
    var = jnp.maximum(ss3_ref[...] * inv_count - mu * mu, 0.0)
    hn = jnp.maximum((h3 - mu) * jax.lax.rsqrt(var + EPS) * g3_ref[...] + be3_ref[...], 0.0)
    f3 = jnp.dot(hn.astype(MXU_DTYPE), w2c_ref[...],
                 preferred_element_type=jnp.float32) + b2c_ref[...]
    m3_ref[...] = jnp.max(f3.reshape(grp, n_pts, f3.shape[-1]), axis=1)


def head_kernel(m1_ref, m2_ref, m3_ref, idx_ref, emb_ref,
                w1a_ref, w1b_ref, w1c_ref, w1t_ref, b1_ref, g_ref, be_ref,
                w2_ref, b2_ref, out_ref):
    """Head: coor_fea = pointnet(x).max(points) = [m1|m2|m3]; type_fea via one-hot
    matmul against the padded embedding table; out_fc = Linear -> BN(rows) -> ReLU ->
    Linear, with the input concat folded into split rows of out_fc.w_1.  Runs in f32.
    # TODO(synk): for very large edge counts this head should be gridded with the same
    # two-pass BN pattern (the E x 4H hidden would not fit v7x's 64 MiB VMEM);
    # BN1D's single-row (E == 1) eval-mode fallback is not implemented."""
    e = idx_ref.shape[0]
    lanes = jax.lax.broadcasted_iota(jnp.int32, (e, emb_ref.shape[0]), 1)
    onehot = (lanes == idx_ref[...]).astype(jnp.float32)                     # (E, 128)
    typ = jnp.dot(onehot, emb_ref[...], preferred_element_type=jnp.float32)  # (E, PE)

    h = (jnp.dot(m1_ref[...], w1a_ref[...], preferred_element_type=jnp.float32)
         + jnp.dot(m2_ref[...], w1b_ref[...], preferred_element_type=jnp.float32)
         + jnp.dot(m3_ref[...], w1c_ref[...], preferred_element_type=jnp.float32)
         + jnp.dot(typ, w1t_ref[...], preferred_element_type=jnp.float32)
         + b1_ref[...])
    mu = jnp.mean(h, axis=0, keepdims=True)
    var = jnp.mean((h - mu) ** 2, axis=0, keepdims=True)
    hn = jnp.maximum((h - mu) * jax.lax.rsqrt(var + EPS) * g_ref[...] + be_ref[...], 0.0)
    out_ref[...] = jnp.dot(hn, w2_ref[...],
                           preferred_element_type=jnp.float32) + b2_ref[...]


# --------------------------------------------------------------------------------------
# pallas_call wrappers
# --------------------------------------------------------------------------------------
def _stats1(x2d, w1, b1, n_tiles, tile_rows):
    _, d_in = x2d.shape
    d_hid = w1.shape[1]
    const = lambda b: (0, 0)
    return pl.pallas_call(
        stats1_kernel,
        grid=(n_tiles,),
        in_specs=[pl.BlockSpec((tile_rows, d_in), lambda b: (b, 0)),
                  pl.BlockSpec((d_in, d_hid), const),      # resident weights
                  pl.BlockSpec((1, d_hid), const)],
        out_specs=(pl.BlockSpec((1, d_hid), const),         # resident accumulators
                   pl.BlockSpec((1, d_hid), const)),
        out_shape=(jax.ShapeDtypeStruct((1, d_hid), jnp.float32),
                   jax.ShapeDtypeStruct((1, d_hid), jnp.float32)),
        compiler_params=pltpu.CompilerParams(
            dimension_semantics=("arbitrary",), vmem_limit_bytes=VMEM_LIMIT),
    )(x2d, w1, b1)


def _apply1_stats2(x2d, w1a, b1a, s1, ss1, g1, be1, w2a, b2a, w1b, b1b,
                   n_tiles, tile_rows, group, n_pts):
    rows, d_in = x2d.shape
    h1 = w1a.shape[1]
    c1 = w2a.shape[1]
    h2 = w1b.shape[1]
    n_poly = n_tiles * group
    const = lambda b: (0, 0)
    kernel = functools.partial(apply1_stats2_kernel, 1.0 / rows, n_pts)
    return pl.pallas_call(
        kernel,
        grid=(n_tiles,),
        in_specs=[pl.BlockSpec((tile_rows, d_in), lambda b: (b, 0)),
                  pl.BlockSpec((d_in, h1), const), pl.BlockSpec((1, h1), const),
                  pl.BlockSpec((1, h1), const), pl.BlockSpec((1, h1), const),
                  pl.BlockSpec((1, h1), const), pl.BlockSpec((1, h1), const),
                  pl.BlockSpec((h1, c1), const), pl.BlockSpec((1, c1), const),
                  pl.BlockSpec((c1, h2), const), pl.BlockSpec((1, h2), const)],
        out_specs=(pl.BlockSpec((tile_rows, c1), lambda b: (b, 0)),   # out1 (MXU dtype)
                   pl.BlockSpec((group, c1), lambda b: (b, 0)),       # m1, sublane-dense
                   pl.BlockSpec((1, h2), const),
                   pl.BlockSpec((1, h2), const)),
        out_shape=(jax.ShapeDtypeStruct((rows, c1), MXU_DTYPE),
                   jax.ShapeDtypeStruct((n_poly, c1), jnp.float32),
                   jax.ShapeDtypeStruct((1, h2), jnp.float32),
                   jax.ShapeDtypeStruct((1, h2), jnp.float32)),
        compiler_params=pltpu.CompilerParams(
            dimension_semantics=("arbitrary",), vmem_limit_bytes=VMEM_LIMIT),
    )(x2d, w1a, b1a, s1, ss1, g1, be1, w2a, b2a, w1b, b1b)


def _apply2_stats3(out1, w1b, b1b, s2, ss2, g2, be2, w2b, b2b, w3t, w3b, b3,
                   n_tiles, tile_rows, group, n_pts):
    rows, c1 = out1.shape
    h2 = w1b.shape[1]
    c2 = w2b.shape[1]
    h3 = w3t.shape[1]
    n_poly = n_tiles * group
    const = lambda b: (0, 0)
    kernel = functools.partial(apply2_stats3_kernel, 1.0 / rows, n_pts)
    return pl.pallas_call(
        kernel,
        grid=(n_tiles,),
        in_specs=[pl.BlockSpec((tile_rows, c1), lambda b: (b, 0)),
                  pl.BlockSpec((c1, h2), const), pl.BlockSpec((1, h2), const),
                  pl.BlockSpec((1, h2), const), pl.BlockSpec((1, h2), const),
                  pl.BlockSpec((1, h2), const), pl.BlockSpec((1, h2), const),
                  pl.BlockSpec((h2, c2), const), pl.BlockSpec((1, c2), const),
                  pl.BlockSpec((c1, h3), const), pl.BlockSpec((c2, h3), const),
                  pl.BlockSpec((1, h3), const)],
        out_specs=(pl.BlockSpec((group, c2), lambda b: (b, 0)),       # m2, sublane-dense
                   pl.BlockSpec((1, h3), const),
                   pl.BlockSpec((1, h3), const)),
        out_shape=(jax.ShapeDtypeStruct((n_poly, c2), jnp.float32),
                   jax.ShapeDtypeStruct((1, h3), jnp.float32),
                   jax.ShapeDtypeStruct((1, h3), jnp.float32)),
        compiler_params=pltpu.CompilerParams(
            dimension_semantics=("arbitrary",), vmem_limit_bytes=VMEM_LIMIT),
    )(out1, w1b, b1b, s2, ss2, g2, be2, w2b, b2b, w3t, w3b, b3)


def _apply3(out1, m2, w3t, w3b, b3, s3, ss3, g3, be3, w2c, b2c,
            n_tiles, tile_rows, group, n_pts):
    rows, c1 = out1.shape
    c2 = m2.shape[1]
    h3 = w3t.shape[1]
    c3 = w2c.shape[1]
    n_poly = n_tiles * group
    const = lambda b: (0, 0)
    kernel = functools.partial(apply3_kernel, 1.0 / rows, n_pts)
    return pl.pallas_call(
        kernel,
        grid=(n_tiles,),
        in_specs=[pl.BlockSpec((tile_rows, c1), lambda b: (b, 0)),
                  pl.BlockSpec((group, c2), lambda b: (b, 0)),
                  pl.BlockSpec((c1, h3), const), pl.BlockSpec((c2, h3), const),
                  pl.BlockSpec((1, h3), const),
                  pl.BlockSpec((1, h3), const), pl.BlockSpec((1, h3), const),
                  pl.BlockSpec((1, h3), const), pl.BlockSpec((1, h3), const),
                  pl.BlockSpec((h3, c3), const), pl.BlockSpec((1, c3), const)],
        out_specs=pl.BlockSpec((group, c3), lambda b: (b, 0)),
        out_shape=jax.ShapeDtypeStruct((n_poly, c3), jnp.float32),
        compiler_params=pltpu.CompilerParams(
            dimension_semantics=("parallel",),    # polygons independent -> megacore
            vmem_limit_bytes=VMEM_LIMIT),
    )(out1, m2, w3t, w3b, b3, s3, ss3, g3, be3, w2c, b2c)


def _head(m1, m2, m3, type_idx, emb, w1a, w1b, w1c, w1t, b1, g, be, w2, b2):
    n_rows = m1.shape[0]
    d_out = w2.shape[1]
    args = (m1, m2, m3, type_idx, emb, w1a, w1b, w1c, w1t, b1, g, be, w2, b2)
    return pl.pallas_call(
        head_kernel,
        out_shape=jax.ShapeDtypeStruct((n_rows, d_out), jnp.float32),
        in_specs=[pl.BlockSpec(memory_space=pltpu.MemorySpace.VMEM)] * len(args),
        out_specs=pl.BlockSpec(memory_space=pltpu.MemorySpace.VMEM),
        compiler_params=pltpu.CompilerParams(vmem_limit_bytes=VMEM_LIMIT),
    )(*args)


# --------------------------------------------------------------------------------------
# Host-side padding helpers (run once) and the forward wrapper
# --------------------------------------------------------------------------------------
def _rup(d):
    return ((d + LANE - 1) // LANE) * LANE


def _pad2(a, rows, cols):
    out = jnp.zeros((rows, cols), a.dtype)
    return out.at[:a.shape[0], :a.shape[1]].set(a)


def _pad_stage(p):
    """Zero-pad an MLP stage's params to lane-multiple widths and pre-cast the matmul
    weights to MXU_DTYPE.  Padded BN channels get gamma = beta = 0 so they stay exactly
    zero through Linear -> BN -> ReLU -> Linear."""
    w1, b1, g, be, w2, b2 = p
    d_in_p, d_hid_p, d_out_p = _rup(w1.shape[0]), _rup(w1.shape[1]), _rup(w2.shape[1])
    return (_pad2(w1, d_in_p, d_hid_p).astype(MXU_DTYPE), _pad2(b1, 1, d_hid_p),
            _pad2(g, 1, d_hid_p), _pad2(be, 1, d_hid_p),
            _pad2(w2, d_hid_p, d_out_p).astype(MXU_DTYPE), _pad2(b2, 1, d_out_p))


def _pick_group(n_poly, n_pts, target_rows):
    """Polygons per grid step.  Either group == n_poly (single tile: block == full
    array) or group % 8 == 0 so the (group, C) max-output blocks are sublane-dense."""
    if n_poly * n_pts <= target_rows:
        return n_poly
    aligned = [p for p in range(8, n_poly + 1, 8) if n_poly % p == 0]
    if not aligned:
        return n_poly                               # no aligned divisor: one big tile
    fitting = [p for p in aligned if p * n_pts <= target_rows]
    return max(fitting) if fitting else min(aligned)


def polygon2embedding_forward(coor_fea, type_idx, params, target_rows=TARGET_ROWS):
    """coor_fea: (B, N, H/4) f32 (output of the external shared_coor_encoder)
       type_idx: (B,) int   per-edge polygon type ids
       returns : (B, H) f32 `g_e_hidden` features."""
    B, N, C = coor_fea.shape
    assert N % 8 == 0, "points-per-polygon must be sublane aligned"
    R = B * N
    group = _pick_group(B, N, target_rows)
    n_tiles = B // group
    tile_rows = group * N

    # ---- fc1 / fc2: straight padded stages ---------------------------------------------
    fc1_p = _pad_stage(params["fc1"])
    fc2_p = _pad_stage(params["fc2"])
    c1 = params["fc1"][4].shape[1]          # out1 width      (H/8)
    c2 = params["fc2"][4].shape[1]          # max(f2) width   (H/8)

    # ---- fc3: fold the [out1 | repeat(max f2)] concat into split weight rows -----------
    w1c, b1c, g3, be3, w2c, b2c = params["fc3"]
    c3 = w2c.shape[1]                       # max(f3) width   (H/4)
    assert w1c.shape[0] == c1 + c2
    p1, p2, p3 = _rup(c1), _rup(c2), _rup(c3)
    h3p = _rup(w1c.shape[1])
    fc3_w_top = _pad2(w1c[:c1], p1, h3p).astype(MXU_DTYPE)
    fc3_w_bot = _pad2(w1c[c1:], p2, h3p).astype(MXU_DTYPE)
    fc3_b1 = _pad2(b1c, 1, h3p)
    fc3_g, fc3_be = _pad2(g3, 1, h3p), _pad2(be3, 1, h3p)
    fc3_w2 = _pad2(w2c, h3p, p3).astype(MXU_DTYPE)
    fc3_b2 = _pad2(b2c, 1, p3)

    # ---- type embedding + out_fc: fold the [coor | type] concat into split rows --------
    emb = params["emb"]
    ce = emb.shape[1]
    pe = _rup(ce)
    emb_p = _pad2(emb, LANE, pe)            # one-hot over 128 lanes only hits rows < 14

    w1o, b1o, go, beo, w2o, b2o = params["out_fc"]
    assert w1o.shape[0] == c1 + c2 + c3 + ce
    ho, oo = _rup(w1o.shape[1]), _rup(w2o.shape[1])
    w1o_m1 = _pad2(w1o[:c1], p1, ho)
    w1o_m2 = _pad2(w1o[c1:c1 + c2], p2, ho)
    w1o_m3 = _pad2(w1o[c1 + c2:c1 + c2 + c3], p3, ho)
    w1o_t = _pad2(w1o[c1 + c2 + c3:], pe, ho)
    b1o_p, go_p, beo_p = _pad2(b1o, 1, ho), _pad2(go, 1, ho), _pad2(beo, 1, ho)
    w2o_p, b2o_p = _pad2(w2o, ho, oo), _pad2(b2o, 1, oo)

    # ---- lane-dense MXU-dtype input slab ------------------------------------------------
    x2d = _pad2(coor_fea.reshape(R, C), R, _rup(C)).astype(MXU_DTYPE)

    # ---- PointNet: fused two-pass (stats -> BN/ReLU/linear/max + next-stage stats) ------
    w1a, b1a, g1, be1, w2a, b2a = fc1_p
    s1, ss1 = _stats1(x2d, w1a, b1a, n_tiles, tile_rows)

    w1b, b1b, g2, be2, w2b, b2b = fc2_p
    out1, m1, s2, ss2 = _apply1_stats2(x2d, w1a, b1a, s1, ss1, g1, be1, w2a, b2a,
                                       w1b, b1b, n_tiles, tile_rows, group, N)

    m2, s3, ss3 = _apply2_stats3(out1, w1b, b1b, s2, ss2, g2, be2, w2b, b2b,
                                 fc3_w_top, fc3_w_bot, fc3_b1,
                                 n_tiles, tile_rows, group, N)

    m3 = _apply3(out1, m2, fc3_w_top, fc3_w_bot, fc3_b1, s3, ss3,
                 fc3_g, fc3_be, fc3_w2, fc3_b2, n_tiles, tile_rows, group, N)

    # ---- head: pointnet(x).max(points) == [m1|m2|m3]; + type embedding; out_fc ---------
    fea = _head(m1, m2, m3, type_idx.reshape(B, 1).astype(jnp.int32), emb_p,
                w1o_m1, w1o_m2, w1o_m3, w1o_t, b1o_p, go_p, beo_p, w2o_p, b2o_p)
    return fea[:, :w2o.shape[1]]


# --------------------------------------------------------------------------------------
# Pure-JAX reference mirroring the PyTorch forward (training-mode BatchNorm)
# --------------------------------------------------------------------------------------
def ref_forward(coor_fea, type_idx, params, mxu_dtype=jnp.float32):
    """`mxu_dtype` only rounds the PointNet matmul operands the same way the kernels
    feed the MXU; with jnp.float32 this is exactly the f32 PyTorch forward."""

    def mlp_bn(x, p, axes):
        w1, b1, g, be, w2, b2 = p
        h = jnp.dot(x.astype(mxu_dtype), w1.astype(mxu_dtype),
                    preferred_element_type=jnp.float32) + b1
        mu = jnp.mean(h, axis=axes, keepdims=True)
        var = jnp.mean((h - mu) ** 2, axis=axes, keepdims=True)
        h = jnp.maximum((h - mu) * jax.lax.rsqrt(var + EPS) * g + be, 0.0)
        return jnp.dot(h.astype(mxu_dtype), w2.astype(mxu_dtype),
                       preferred_element_type=jnp.float32) + b2

    out1 = mlp_bn(coor_fea, params["fc1"], (0, 1))
    f2 = mlp_bn(out1, params["fc2"], (0, 1))
    cat2 = jnp.concatenate(
        [out1, jnp.broadcast_to(f2.max(axis=1, keepdims=True), out1.shape)], axis=-1)
    f3 = mlp_bn(cat2, params["fc3"], (0, 1))
    pnet = jnp.concatenate(
        [cat2, jnp.broadcast_to(f3.max(axis=1, keepdims=True), cat2.shape)], axis=-1)

    coor = pnet.max(axis=1)                                   # (B, H/2)
    typ = params["emb"][type_idx]                             # (B, H/2)
    fea = jnp.concatenate([coor, typ], axis=-1)               # (B, H)

    w1, b1, g, be, w2, b2 = params["out_fc"]                  # head stays f32 in-kernel
    h = fea @ w1 + b1
    mu = jnp.mean(h, axis=0, keepdims=True)
    var = jnp.mean((h - mu) ** 2, axis=0, keepdims=True)
    h = jnp.maximum((h - mu) * jax.lax.rsqrt(var + EPS) * g + be, 0.0)
    return h @ w2 + b2


def init_mlp_params(key, d_in, d_hid, d_out):
    k1, k2, k3, k4 = jax.random.split(key, 4)
    w1 = jax.random.normal(k1, (d_in, d_hid), jnp.float32) * 0.1
    b1 = jax.random.normal(k2, (1, d_hid), jnp.float32) * 0.1
    gamma = jnp.ones((1, d_hid), jnp.float32)     # BatchNorm1d default affine init
    beta = jnp.zeros((1, d_hid), jnp.float32)
    w2 = jax.random.normal(k3, (d_hid, d_out), jnp.float32) * 0.1
    b2 = jax.random.normal(k4, (1, d_out), jnp.float32) * 0.1
    return (w1, b1, gamma, beta, w2, b2)


if __name__ == "__main__":
    hidden_dim = 32            # args.hidden_dim
    B, N = 64, 16              # polygons (graph edges), points per polygon

    key = jax.random.PRNGKey(0)
    kx, kt, k1, k2, k3, ke, ko = jax.random.split(key, 7)

    coor_fea = jax.random.normal(kx, (B, N, hidden_dim // 4), jnp.float32)
    type_idx = jax.random.randint(kt, (B,), 0, 14, jnp.int32)

    params = {
        "fc1": init_mlp_params(k1, hidden_dim // 4, hidden_dim // 4, hidden_dim // 8),
        "fc2": init_mlp_params(k2, hidden_dim // 8, hidden_dim // 8, hidden_dim // 8),
        "fc3": init_mlp_params(k3, hidden_dim // 4, hidden_dim // 4, hidden_dim // 4),
        "emb": jax.random.normal(ke, (14, hidden_dim // 2), jnp.float32),
        "out_fc": init_mlp_params(ko, hidden_dim, hidden_dim * 4, hidden_dim),
    }

    # target_rows=256 exercises the multi-tile grid / accumulator path at this small B
    # while keeping 256-row (MXU-friendly) tiles; production sizes use the 1024 default.
    out = jax.block_until_ready(
        polygon2embedding_forward(coor_fea, type_idx, params, target_rows=256))
    assert out.shape == (B, hidden_dim), out.shape

    # Reference mirrors the PyTorch math; MXU_DTYPE only rounds the PointNet matmul
    # operands identically to the kernels (with MXU_DTYPE = float32 the kernels match
    # the pure-f32 PyTorch forward to ~1e-5).  Tolerance covers rare 1-ulp bf16
    # rounding divergences amplified through the BatchNorms.
    ref = jax.block_until_ready(ref_forward(coor_fea, type_idx, params, MXU_DTYPE))
    np.testing.assert_allclose(np.asarray(out), np.asarray(ref), rtol=2e-2, atol=2e-2)

    print("KERNEL_OK")
</pallas_src>

<mosaic_0001>
module attributes {stable_mosaic.version = 11 : i64} {
  func.func @stats1_kernel(%arg0: i32, %arg1: memref<256x128xbf16, #tpu.memory_space<vmem>>, %arg2: memref<128x128xbf16, #tpu.memory_space<vmem>>, %arg3: memref<1x128xf32, #tpu.memory_space<vmem>>, %arg4: memref<1x128xf32, #tpu.memory_space<vmem>>, %arg5: memref<1x128xf32, #tpu.memory_space<vmem>>) attributes {dimension_semantics = [#tpu.dimension_semantics<arbitrary>], iteration_bounds = array<i64: 4>, scalar_prefetch = 0 : i64, scratch_operands = 0 : i64, tpu.core_type = #tpu.core_type<tc>, window_params = [{transform_indices = @transform_0, window_bounds = array<i64: 256, 128>}, {pipeline_mode = #tpu.pipeline_mode<synchronous>, transform_indices = @transform_1, window_bounds = array<i64: 128, 128>}, {pipeline_mode = #tpu.pipeline_mode<synchronous>, transform_indices = @transform_2, window_bounds = array<i64: 1, 128>}, {pipeline_mode = #tpu.pipeline_mode<synchronous>, transform_indices = @transform_3, window_bounds = array<i64: 1, 128>}, {pipeline_mode = #tpu.pipeline_mode<synchronous>, transform_indices = @transform_4, window_bounds = array<i64: 1, 128>}]} {
    %c0_i32 = arith.constant 0 : i32
    %0 = arith.cmpi eq, %arg0, %c0_i32 : i32
    %1 = arith.extui %0 : i1 to i32
    %c0_i32_0 = arith.constant 0 : i32
    %2 = arith.cmpi ne, %1, %c0_i32_0 : i32
    scf.if %2 {
      %cst_16 = arith.constant 0.000000e+00 : f32
      %20 = vector.broadcast %cst_16 : f32 to vector<1x128xf32>
      %c0_17 = arith.constant 0 : index
      %c0_18 = arith.constant 0 : index
      %21 = vector.load %arg4[%c0_17, %c0_18] : memref<1x128xf32, #tpu.memory_space<vmem>>, vector<1x128xf32>
      tpu.vector_store %arg4[%c0_17, %c0_18], %20 {strides = array<i32>} : memref<1x128xf32, #tpu.memory_space<vmem>>, vector<1x128xf32>,
      %cst_19 = arith.constant 0.000000e+00 : f32
      %22 = vector.broadcast %cst_19 : f32 to vector<1x128xf32>
      %c0_20 = arith.constant 0 : index
      %c0_21 = arith.constant 0 : index
      %23 = vector.load %arg5[%c0_20, %c0_21] : memref<1x128xf32, #tpu.memory_space<vmem>>, vector<1x128xf32>
      tpu.vector_store %arg5[%c0_20, %c0_21], %22 {strides = array<i32>} : memref<1x128xf32, #tpu.memory_space<vmem>>, vector<1x128xf32>,
    } else {
    }
    %c0 = arith.constant 0 : index
    %c0_1 = arith.constant 0 : index
    %3 = vector.load %arg1[%c0, %c0_1] : memref<256x128xbf16, #tpu.memory_space<vmem>>, vector<256x128xbf16>
    %c0_2 = arith.constant 0 : index
    %c0_3 = arith.constant 0 : index
    %4 = vector.load %arg2[%c0_2, %c0_3] : memref<128x128xbf16, #tpu.memory_space<vmem>>, vector<128x128xbf16>
    %cst = arith.constant dense<0.000000e+00> : vector<256x128xf32>
    %5 = tpu.matmul %3, %4, %cst {dimension_numbers = #tpu.dot_dimension_numbers<[1], [0], [0], [1], [0, 0, 1, 1], [], []>} : vector<256x128xbf16>, vector<128x128xbf16>, vector<256x128xf32> -> vector<256x128xf32>
    %c0_4 = arith.constant 0 : index
    %c0_5 = arith.constant 0 : index
    %6 = vector.load %arg3[%c0_4, %c0_5] : memref<1x128xf32, #tpu.memory_space<vmem>>, vector<1x128xf32>
    %7 = vector.broadcast %6 : vector<1x128xf32> to vector<256x128xf32>
    %8 = arith.addf %5, %7 : vector<256x128xf32>
    %c0_6 = arith.constant 0 : index
    %c0_7 = arith.constant 0 : index
    %9 = vector.load %arg4[%c0_6, %c0_7] : memref<1x128xf32, #tpu.memory_space<vmem>>, vector<1x128xf32>
    %cst_8 = arith.constant dense<0.000000e+00> : vector<128xf32>
    %10 = vector.multi_reduction <add>, %8, %cst_8 [0] : vector<256x128xf32> to vector<128xf32>
    %11 = vector.shape_cast %10 : vector<128xf32> to vector<1x128xf32>
    %12 = arith.addf %9, %11 : vector<1x128xf32>
    %c0_9 = arith.constant 0 : index
    %c0_10 = arith.constant 0 : index
    %13 = vector.load %arg4[%c0_9, %c0_10] : memref<1x128xf32, #tpu.memory_space<vmem>>, vector<1x128xf32>
    tpu.vector_store %arg4[%c0_9, %c0_10], %12 {strides = array<i32>} : memref<1x128xf32, #tpu.memory_space<vmem>>, vector<1x128xf32>,
    %c0_11 = arith.constant 0 : index
    %c0_12 = arith.constant 0 : index
    %14 = vector.load %arg5[%c0_11, %c0_12] : memref<1x128xf32, #tpu.memory_space<vmem>>, vector<1x128xf32>
    %15 = arith.mulf %8, %8 : vector<256x128xf32>
    %cst_13 = arith.constant dense<0.000000e+00> : vector<128xf32>
    %16 = vector.multi_reduction <add>, %15, %cst_13 [0] : vector<256x128xf32> to vector<128xf32>
    %17 = vector.shape_cast %16 : vector<128xf32> to vector<1x128xf32>
    %18 = arith.addf %14, %17 : vector<1x128xf32>
    %c0_14 = arith.constant 0 : index
    %c0_15 = arith.constant 0 : index
    %19 = vector.load %arg5[%c0_14, %c0_15] : memref<1x128xf32, #tpu.memory_space<vmem>>, vector<1x128xf32>
    tpu.vector_store %arg5[%c0_14, %c0_15], %18 {strides = array<i32>} : memref<1x128xf32, #tpu.memory_space<vmem>>, vector<1x128xf32>,
    return
  }
  func.func @transform_0(%arg0: i32) -> (i32, i32) {
    %c0_i32 = arith.constant 0 : i32
    %c0_i32_0 = arith.constant 0 : i32
    return %arg0, %c0_i32 : i32, i32
  }
  func.func @transform_1(%arg0: i32) -> (i32, i32) {
    %c0_i32 = arith.constant 0 : i32
    %c0_i32_0 = arith.constant 0 : i32
    %c0_i32_1 = arith.constant 0 : i32
    return %c0_i32, %c0_i32_0 : i32, i32
  }
  func.func @transform_2(%arg0: i32) -> (i32, i32) {
    %c0_i32 = arith.constant 0 : i32
    %c0_i32_0 = arith.constant 0 : i32
    %c0_i32_1 = arith.constant 0 : i32
    return %c0_i32, %c0_i32_0 : i32, i32
  }
  func.func @transform_3(%arg0: i32) -> (i32, i32) {
    %c0_i32 = arith.constant 0 : i32
    %c0_i32_0 = arith.constant 0 : i32
    %c0_i32_1 = arith.constant 0 : i32
    return %c0_i32, %c0_i32_0 : i32, i32
  }
  func.func @transform_4(%arg0: i32) -> (i32, i32) {
    %c0_i32 = arith.constant 0 : i32
    %c0_i32_0 = arith.constant 0 : i32
    %c0_i32_1 = arith.constant 0 : i32
    return %c0_i32, %c0_i32_0 : i32, i32
  }
}

</mosaic_0001>

<llo_original>
// kernel: tpu_custom_call.1
$region0: #{tpu_custom_call.1}
  #allocation0 [shape = 'u32[]', space=smem, size = 0x4, offset = 0x4, fixed_abs, tag = 'smem constant byte address 0x4 - core index']
  #allocation1 [shape = 'u32[144,128]{1,0:T(1,128)}', space=vmem, size = 0x12000, scoped, tag = 'internal scratch']
  %s0 = inlined_call_operand.hbm [shape: bf16[1024,128], index: 0, kind: input, shape index: {}]
  %s1 = inlined_call_operand.hbm [shape: bf16[128,128], index: 1, kind: input, shape index: {}]
  %s2 = inlined_call_operand.vmem [shape: f32[1,128], index: 2, kind: input, shape index: {}]
  %s3 = inlined_call_operand.hbm [shape: f32[1,128], index: 3, kind: output, shape index: {0}]
  %s4 = inlined_call_operand.hbm [shape: f32[1,128], index: 4, kind: output, shape index: {1}]
  %5 = xla_tuple %s3, %s4
  %s6 = sld [smem:[#allocation0]]
  $region65: #{tpu_custom_call.1} parent=0
    _
  %s8 = ssub.s32 1, %s6
  %s9 = scalar_select 0, %s8, %s6
  $region1: #{tpu_custom_call.1} parent=0
    #allocation2 [shape = 'u8[131072]{0}', space=vmem, size = 0x20000, scoped, tag = 'input window, operand 0']
    #allocation3 [shape = 's32[2]{0}', space=sflag, size = 0x8, scoped, tag = 'scoped memory for tpu_custom_call.1']
    #allocation4 [shape = 's32[2]{0}', space=sflag, size = 0x8, scoped, tag = 'scoped memory for tpu_custom_call.1']
    #allocation5 [shape = 'u8[32768]{0}', space=vmem, size = 0x8000, scoped, tag = 'input window, operand 1, single buffered']
    #allocation6 [shape = 's32[1]{0}', space=sflag, size = 0x4, scoped, tag = 'scoped memory for tpu_custom_call.1']
    #allocation7 [shape = 'u8[512]{0}', space=vmem, size = 0x400, scoped, tag = 'output window, operand 0, single buffered']
    #allocation8 [shape = 'u8[512]{0}', space=vmem, size = 0x400, scoped, tag = 'output window, operand 1, single buffered']
    #allocation9 [shape = 's32[1]{0}', space=sflag, size = 0x4, scoped, tag = 'scoped memory for tpu_custom_call.1']
    %10 = vsyncpa [#allocation3], 0
    %s11 = scalar_lea.sflag [#allocation3], 1
    %12 = vsyncpa %s11, 0
    %13 = vsyncpa [#allocation6], 0
    %14 = vsyncpa [#allocation4], 0
    %15 = vsyncpa [#allocation9], 0
    loop: start=0, step=1, limit=6
    $region2: #{tpu_custom_call.1} parent=1 // loop_pre_header
      _
    $region3: #{tpu_custom_call.1} parent=1 // loop_header
      %s17 = sphi 0, %s21
      %p18 = scmp.ge.s32.totalorder %s17, 6
      %s27 = sphi 0, %s29
      %s30 = sphi 0, %s27
      %s31 = sphi 0, %s30
      %s47 = sphi 0, %s31
      %s51 = sphi 0, %s51
      %s53 = sphi 0, %s51
      %s54 = sphi 0, %s53
      %s68 = sphi 0, %s54
      %s72 = sphi 0, %s72
      %s74 = sphi 0, %s72
      %s75 = sphi 0, %s74
      %s89 = sphi 0, %s75
      %s93 = sphi 0, %s93
      %s95 = sphi 0, %s93
      %s96 = sphi 0, %s95
      %s110 = sphi 0, %s96
      %s114 = sphi 0, %s114
      %s116 = sphi 0, %s114
      %s117 = sphi 0, %s116
      %s131 = sphi 0, %s117
    $region4: #{tpu_custom_call.1} parent=1 // loop_header_branch
      %20 = sbr.rel (%p18) target = $region8
    $region5: #{tpu_custom_call.1} parent=1 // loop_body
      %s22 = ssub.s32 %s17, 1
      %s23 = ssub.s32 %s17, 2
      %s24 = sadd.s32 %s17, 1
      %s25 = ssub.s32 %s17, %s24
      %p26 = scmp.eq.s32.totalorder %s25, 0
      %s28 = sadd.s32 %s27, 1
      %s29 = scalar_select %p26, %s27, %s28
      %p32 = pneg %p26
      %p33 = scmp.eq.s32.totalorder %s17, 3
      %p34 = por %p32, %p33
      %p35 = scmp.ne.s32.totalorder %s27, %s30
      %p36 = scmp.eq.s32.totalorder %s17, 0
      %p37 = por %p35, %p36
      %p38 = scmp.ne.s32.totalorder %s27, %s30
      %p39 = scmp.eq.s32.totalorder %s22, 3
      %p40 = por %p38, %p39
      %p41 = scmp.ne.s32.totalorder %s30, %s31
      %p42 = scmp.eq.s32.totalorder %s22, 0
      %p43 = por %p41, %p42
      %p44 = scmp.ne.s32.totalorder %s30, %s31
      %p45 = scmp.eq.s32.totalorder %s23, 3
      %p46 = por %p44, %p45
      %p48 = scmp.ne.s32.totalorder %s31, %s47
      %p49 = scmp.eq.s32.totalorder %s23, 0
      %p50 = por %p48, %p49
      %s52 = sadd.s32 %s51, 1
      %p55 = scmp.eq.s32.totalorder %s17, 3
      %p56 = scmp.ne.s32.totalorder %s51, %s53
      %p57 = scmp.eq.s32.totalorder %s17, 0
      %p58 = por %p56, %p57
      %p59 = scmp.ne.s32.totalorder %s51, %s53
      %p60 = scmp.eq.s32.totalorder %s22, 3
      %p61 = por %p59, %p60
      %p62 = scmp.ne.s32.totalorder %s53, %s54
      %p63 = scmp.eq.s32.totalorder %s22, 0
      %p64 = por %p62, %p63
      %p65 = scmp.ne.s32.totalorder %s53, %s54
      %p66 = scmp.eq.s32.totalorder %s23, 3
      %p67 = por %p65, %p66
      %p69 = scmp.ne.s32.totalorder %s54, %s68
      %p70 = scmp.eq.s32.totalorder %s23, 0
      %p71 = por %p69, %p70
      %s73 = sadd.s32 %s72, 1
      %p76 = scmp.eq.s32.totalorder %s17, 3
      %p77 = scmp.ne.s32.totalorder %s72, %s74
      %p78 = scmp.eq.s32.totalorder %s17, 0
      %p79 = por %p77, %p78
      %p80 = scmp.ne.s32.totalorder %s72, %s74
      %p81 = scmp.eq.s32.totalorder %s22, 3
      %p82 = por %p80, %p81
      %p83 = scmp.ne.s32.totalorder %s74, %s75
      %p84 = scmp.eq.s32.totalorder %s22, 0
      %p85 = por %p83, %p84
      %p86 = scmp.ne.s32.totalorder %s74, %s75
      %p87 = scmp.eq.s32.totalorder %s23, 3
      %p88 = por %p86, %p87
      %p90 = scmp.ne.s32.totalorder %s75, %s89
      %p91 = scmp.eq.s32.totalorder %s23, 0
      %p92 = por %p90, %p91
      %s94 = sadd.s32 %s93, 1
      %p97 = scmp.eq.s32.totalorder %s17, 3
      %p98 = scmp.ne.s32.totalorder %s93, %s95
      %p99 = scmp.eq.s32.totalorder %s17, 0
      %p100 = por %p98, %p99
      %p101 = scmp.ne.s32.totalorder %s93, %s95
      %p102 = scmp.eq.s32.totalorder %s22, 3
      %p103 = por %p101, %p102
      %p104 = scmp.ne.s32.totalorder %s95, %s96
      %p105 = scmp.eq.s32.totalorder %s22, 0
      %p106 = por %p104, %p105
      %p107 = scmp.ne.s32.totalorder %s95, %s96
      %p108 = scmp.eq.s32.totalorder %s23, 3
      %p109 = por %p107, %p108
      %p111 = scmp.ne.s32.totalorder %s96, %s110
      %p112 = scmp.eq.s32.totalorder %s23, 0
      %p113 = por %p111, %p112
      %s115 = sadd.s32 %s114, 1
      %p118 = scmp.eq.s32.totalorder %s17, 3
      %p119 = scmp.ne.s32.totalorder %s114, %s116
      %p120 = scmp.eq.s32.totalorder %s17, 0
      %p121 = por %p119, %p120
      %p122 = scmp.ne.s32.totalorder %s114, %s116
      %p123 = scmp.eq.s32.totalorder %s22, 3
      %p124 = por %p122, %p123
      %p125 = scmp.ne.s32.totalorder %s116, %s117
      %p126 = scmp.eq.s32.totalorder %s22, 0
      %p127 = por %p125, %p126
      %p128 = scmp.ne.s32.totalorder %s116, %s117
      %p129 = scmp.eq.s32.totalorder %s23, 3
      %p130 = por %p128, %p129
      %p132 = scmp.ne.s32.totalorder %s117, %s131
      %p133 = scmp.eq.s32.totalorder %s23, 0
      %p134 = por %p132, %p133
      %p135 = scmp.le.s32.totalorder 1, %s17
      %p136 = scmp.lt.s32.totalorder %s17, 5
      %p137 = pnand %p135, %p136
      %p138 = pneg %p137
      // Predicated region
      $region9: #{tpu_custom_call.1} parent=5 // pred_check
        _
      $region10: #{tpu_custom_call.1} parent=5 // pred_check_branch
        %140 = sbr.rel (%p137) target = $region12
      $region11: #{tpu_custom_call.1} parent=5 // pred_region
        %s141 = ssub.s32 %s17, 1
        // Predicated region
        $region13: #{tpu_custom_call.1} parent=11 // pred_check
          %p142 = pneg %p64
        $region14: #{tpu_custom_call.1} parent=11 // pred_check_branch
          %144 = sbr.rel (%p142) target = $region16
        $region15: #{tpu_custom_call.1} parent=11 // pred_region
          %s146 = ssub.s32 1024, 1024
          %147 = vsyncadd [#allocation6], %s146
          %s148 = sshll.u32 [#allocation5], 4
          %s149 = int_to_ptr.vmem [resolvable:$true] %s148
          %154 = dma.hbm_to_vmem [thread:$0]  %s1, 1024, %s149, [#allocation6], 64, 64, 4
        $region16: #{tpu_custom_call.1} parent=11 // pred_fallthru
          _
        // Predicated region
        $region17: #{tpu_custom_call.1} parent=11 // pred_check
          %p155 = pneg %p85
        $region18: #{tpu_custom_call.1} parent=11 // pred_check_branch
          %157 = sbr.rel (%p155) target = $region20
        $region19: #{tpu_custom_call.1} parent=11 // pred_region
          _
        $region20: #{tpu_custom_call.1} parent=11 // pred_fallthru
          _
      $region12: #{tpu_custom_call.1} parent=5 // pred_fallthru
        _
      %p158 = scmp.lt.s32.totalorder %s17, 4
      // Predicated region
      $region21: #{tpu_custom_call.1} parent=5 // pred_check
        %p159 = pneg %p158
      $region22: #{tpu_custom_call.1} parent=5 // pred_check_branch
        %161 = sbr.rel (%p159) target = $region24
      $region23: #{tpu_custom_call.1} parent=5 // pred_region
        // Predicated region
        $region25: #{tpu_custom_call.1} parent=23 // pred_check
          %p162 = pneg %p37
        $region26: #{tpu_custom_call.1} parent=23 // pred_check_branch
          %164 = sbr.rel (%p162) target = $region28
        $region27: #{tpu_custom_call.1} parent=23 // pred_region
          %s165 = sand.u32 %s27, 1
          %s166 = scalar_lea.sflag [#allocation3], %s165
          %s167 = sand.u32 %s27, 1
          %s168 = smul.addr %s167, 128
          %s169 = scalar_lea.vmem [#allocation2], %s168
          %s170 = smul.u32 32, %s17
          %s172 = ssub.s32 2048, 2048
          %173 = vsyncadd %s166, %s172
          %s174 = smul.addr %s170, 64
          %s175 = scalar_lea.hbm %s0, %s174
          %s176 = sshll.u32 %s169, 4
          %s177 = int_to_ptr.vmem [resolvable:$true] %s176
          %182 = dma.hbm_to_vmem [thread:$0]  %s175, 2048, %s177, %s166, 64, 64, 4
        $region28: #{tpu_custom_call.1} parent=23 // pred_fallthru
          _
      $region24: #{tpu_custom_call.1} parent=5 // pred_fallthru
        _
      %p183 = scmp.le.s32.totalorder 1, %s17
      %p184 = scmp.lt.s32.totalorder %s17, 5
      %p185 = pnand %p183, %p184
      %p186 = pneg %p185
      // Predicated region
      $region29: #{tpu_custom_call.1} parent=5 // pred_check
        _
      $region30: #{tpu_custom_call.1} parent=5 // pred_check_branch
        %188 = sbr.rel (%p185) target = $region32
      $region31: #{tpu_custom_call.1} parent=5 // pred_region
        %s189 = ssub.s32 %s17, 1
        %s190 = sand.u32 %s30, 1
        %s191 = scalar_lea.sflag [#allocation3], %s190
        %s192 = sand.u32 %s30, 1
        %s193 = smul.addr %s192, 128
        %s194 = scalar_lea.vmem [#allocation2], %s193
        // Predicated region
        $region33: #{tpu_custom_call.1} parent=31 // pred_check
          %p195 = pneg %p43
        $region34: #{tpu_custom_call.1} parent=31 // pred_check_branch
          %197 = sbr.rel (%p195) target = $region36
        $region35: #{tpu_custom_call.1} parent=31 // pred_region
          %198 = dma.done %s191, 2048
        $region36: #{tpu_custom_call.1} parent=31 // pred_fallthru
          _
        // Predicated region
        $region37: #{tpu_custom_call.1} parent=31 // pred_check
          %p199 = pneg %p64
        $region38: #{tpu_custom_call.1} parent=31 // pred_check_branch
          %201 = sbr.rel (%p199) target = $region40
        $region39: #{tpu_custom_call.1} parent=31 // pred_region
          %202 = dma.done [#allocation6], 1024
        $region40: #{tpu_custom_call.1} parent=31 // pred_fallthru
          _
        %s203 = sand.u32 %s30, 1
        %s204 = scalar_lea.sflag [#allocation3], %s203
        %s205 = sand.u32 %s30, 1
        %s206 = smul.addr %s205, 128
        %s207 = scalar_lea.vmem [#allocation2], %s206
        %p208 = pneg %p43
        %p209 = pneg %p40
        %p210 = pneg %p64
        %p211 = pneg %p61
        %p212 = pneg %p85
        %p213 = pneg %p82
        %p214 = pneg %p106
        %p215 = pneg %p103
        %p216 = pneg %p127
        %p217 = pneg %p124
        %s218 = smul.u32 32, %s22
        %p220 = scmp.eq.s32.totalorder %s22, 0
        // Predicated region
        $region41: #{tpu_custom_call.1} parent=31 // pred_check
          %p221 = pneg %p220
        $region42: #{tpu_custom_call.1} parent=31 // pred_check_branch
          %223 = sbr.rel (%p221) target = $region44
        $region43: #{tpu_custom_call.1} parent=31 // pred_region
          %224 = vst [vmem:[#allocation7] sm:$0x1] 0.0
          %225 = vst [vmem:[#allocation8] sm:$0x1] 0.0
        $region44: #{tpu_custom_call.1} parent=31 // pred_fallthru
          _
        %v226 = vld [vmem:[%s194] sm:$0xf]
        %v227 = vld [vmem:[%s194 + $0x4] sm:$0xf]
        %v228 = vld [vmem:[%s194 + $0x8] sm:$0xf]
        %v229 = vld [vmem:[%s194 + $0xc] sm:$0xf]
        %v230 = vld [vmem:[%s194 + $0x10] sm:$0xf]
        %v231 = vld [vmem:[%s194 + $0x14] sm:$0xf]
        %v232 = vld [vmem:[%s194 + $0x18] sm:$0xf]
        %v233 = vld [vmem:[%s194 + $0x1c] sm:$0xf]
        %v234 = vld [vmem:[%s194 + $0x20] sm:$0xf]
        %v235 = vld [vmem:[%s194 + $0x24] sm:$0xf]
        %v236 = vld [vmem:[%s194 + $0x28] sm:$0xf]
        %v237 = vld [vmem:[%s194 + $0x2c] sm:$0xf]
        %v238 = vld [vmem:[%s194 + $0x30] sm:$0xf]
        %v239 = vld [vmem:[%s194 + $0x34] sm:$0xf]
        %v240 = vld [vmem:[%s194 + $0x38] sm:$0xf]
        %v241 = vld [vmem:[%s194 + $0x3c] sm:$0xf]
        %v242 = vld [vmem:[%s194 + $0x40] sm:$0xf]
        %v243 = vld [vmem:[%s194 + $0x44] sm:$0xf]
        %v244 = vld [vmem:[%s194 + $0x48] sm:$0xf]
        %v245 = vld [vmem:[%s194 + $0x4c] sm:$0xf]
        %v246 = vld [vmem:[%s194 + $0x50] sm:$0xf]
        %v247 = vld [vmem:[%s194 + $0x54] sm:$0xf]
        %v248 = vld [vmem:[%s194 + $0x58] sm:$0xf]
        %v249 = vld [vmem:[%s194 + $0x5c] sm:$0xf]
        %v250 = vld [vmem:[%s194 + $0x60] sm:$0xf]
        %v251 = vld [vmem:[%s194 + $0x64] sm:$0xf]
        %v252 = vld [vmem:[%s194 + $0x68] sm:$0xf]
        %v253 = vld [vmem:[%s194 + $0x6c] sm:$0xf]
        %v254 = vld [vmem:[%s194 + $0x70] sm:$0xf]
        %v255 = vld [vmem:[%s194 + $0x74] sm:$0xf]
        %v256 = vld [vmem:[%s194 + $0x78] sm:$0xf]
        %v257 = vld [vmem:[%s194 + $0x7c] sm:$0xf]
        %v258 = vld [vmem:[#allocation5] sm:$0xf]
        %v259 = vld [vmem:[#allocation5 + $0x4] sm:$0xf]
        %v260 = vld [vmem:[#allocation5 + $0x8] sm:$0xf]
        %v261 = vld [vmem:[#allocation5 + $0xc] sm:$0xf]
        %v262 = vld [vmem:[#allocation5 + $0x10] sm:$0xf]
        %v263 = vld [vmem:[#allocation5 + $0x14] sm:$0xf]
        %v264 = vld [vmem:[#allocation5 + $0x18] sm:$0xf]
        %v265 = vld [vmem:[#allocation5 + $0x1c] sm:$0xf]
        %v266 = vld [vmem:[#allocation5 + $0x20] sm:$0xf]
        %v267 = vld [vmem:[#allocation5 + $0x24] sm:$0xf]
        %v268 = vld [vmem:[#allocation5 + $0x28] sm:$0xf]
        %v269 = vld [vmem:[#allocation5 + $0x2c] sm:$0xf]
        %v270 = vld [vmem:[#allocation5 + $0x30] sm:$0xf]
        %v271 = vld [vmem:[#allocation5 + $0x34] sm:$0xf]
        %v272 = vld [vmem:[#allocation5 + $0x38] sm:$0xf]
        %v273 = vld [vmem:[#allocation5 + $0x3c] sm:$0xf]
        %v274 = vld [vmem:[%s2] sm:$0x1]
        %v276 = vlaneseq
        %v277 = vshrl.u32 %v276, 7
        %v278 = vsub.s32 0, %v277
        %v279 = vrot.slane %v274, %v278
        %v313 = vunpack.c.l.b16 %v226
        %v314 = vunpack.c.l.b16 %v227
        %v315 = vunpack.c.l.b16 %v228
        %v316 = vunpack.c.l.b16 %v229
        %v317 = vunpack.c.l.b16 %v230
        %v318 = vunpack.c.l.b16 %v231
        %v319 = vunpack.c.l.b16 %v232
        %v320 = vunpack.c.l.b16 %v233
        %v321 = vunpack.c.l.b16 %v234
        %v322 = vunpack.c.l.b16 %v235
        %v323 = vunpack.c.l.b16 %v236
        %v324 = vunpack.c.l.b16 %v237
        %v325 = vunpack.c.l.b16 %v238
        %v326 = vunpack.c.l.b16 %v239
        %v327 = vunpack.c.l.b16 %v240
        %v328 = vunpack.c.l.b16 %v241
        %v329 = vunpack.c.l.b16 %v242
        %v330 = vunpack.c.l.b16 %v243
        %v331 = vunpack.c.l.b16 %v244
        %v332 = vunpack.c.l.b16 %v245
        %v333 = vunpack.c.l.b16 %v246
        %v334 = vunpack.c.l.b16 %v247
        %v335 = vunpack.c.l.b16 %v248
        %v336 = vunpack.c.l.b16 %v249
        %v337 = vunpack.c.l.b16 %v250
        %v338 = vunpack.c.l.b16 %v251
        %v339 = vunpack.c.l.b16 %v252
        %v340 = vunpack.c.l.b16 %v253
        %v341 = vunpack.c.l.b16 %v254
        %v342 = vunpack.c.l.b16 %v255
        %v343 = vunpack.c.l.b16 %v256
        %v344 = vunpack.c.l.b16 %v257
        %v345 = vpack.c.b16 %v314, %v313
        %v346 = vpack.c.b16 %v316, %v315
        %v347 = vpack.c.b16 %v318, %v317
        %v348 = vpack.c.b16 %v320, %v319
        %v349 = vpack.c.b16 %v322, %v321
        %v350 = vpack.c.b16 %v324, %v323
        %v351 = vpack.c.b16 %v326, %v325
        %v352 = vpack.c.b16 %v328, %v327
        %v353 = vpack.c.b16 %v330, %v329
        %v354 = vpack.c.b16 %v332, %v331
        %v355 = vpack.c.b16 %v334, %v333
        %v356 = vpack.c.b16 %v336, %v335
        %v357 = vpack.c.b16 %v338, %v337
        %v358 = vpack.c.b16 %v340, %v339
        %v359 = vpack.c.b16 %v342, %v341
        %v360 = vpack.c.b16 %v344, %v343
        %v393 = vunpack.c.l.b16 %v258
        %v394 = vunpack.c.l.b16 %v259
        %v395 = vunpack.c.l.b16 %v260
        %v396 = vunpack.c.l.b16 %v261
        %v397 = vunpack.c.l.b16 %v262
        %v398 = vunpack.c.l.b16 %v263
        %v399 = vunpack.c.l.b16 %v264
        %v400 = vunpack.c.l.b16 %v265
        %v401 = vunpack.c.l.b16 %v266
        %v402 = vunpack.c.l.b16 %v267
        %v403 = vunpack.c.l.b16 %v268
        %v404 = vunpack.c.l.b16 %v269
        %v405 = vunpack.c.l.b16 %v270
        %v406 = vunpack.c.l.b16 %v271
        %v407 = vunpack.c.l.b16 %v272
        %v408 = vunpack.c.l.b16 %v273
        %v409 = vpack.c.b16 %v394, %v393
        %v410 = vpack.c.b16 %v396, %v395
        %v411 = vpack.c.b16 %v398, %v397
        %v412 = vpack.c.b16 %v400, %v399
        %v413 = vpack.c.b16 %v402, %v401
        %v414 = vpack.c.b16 %v404, %v403
        %v415 = vpack.c.b16 %v406, %v405
        %v416 = vpack.c.b16 %v408, %v407
        %425 = vmatprep.subr.bf16.mxu0 0
        %426 = vmatpush1.bf16.msra.mxu0 %v409
        %427 = vmatprep.subr.bf16.mxu0 0
        %428 = vmatpush1.bf16.msra.mxu0 %v410
        %429 = vmatprep.subr.bf16.mxu0 0
        %430 = vmatpush1.bf16.msra.mxu0 %v411
        %431 = vmatprep.subr.bf16.mxu0 0
        %432 = vmatpush1.bf16.msra.mxu0 %v412
        %433 = vmatprep.subr.bf16.mxu0 0
        %434 = vmatpush1.bf16.msra.mxu0 %v413
        %435 = vmatprep.subr.bf16.mxu0 0
        %436 = vmatpush1.bf16.msra.mxu0 %v414
        %437 = vmatprep.subr.bf16.mxu0 0
        %438 = vmatpush1.bf16.msra.mxu0 %v415
        %439 = vmatprep.subr.bf16.mxu0 0
        %440 = vmatpush1.bf16.msra.mxu0 %v416
        %441 = vmatprep.subr.bf16.mxu0 0
        %442 = vmatpush1.bf16.msra.mxu0 0
        %443 = vmatprep.subr.bf16.mxu0 0
        %444 = vmatpush1.bf16.msra.mxu0 0
        %445 = vmatprep.subr.bf16.mxu0 0
        %446 = vmatpush1.bf16.msra.mxu0 0
        %447 = vmatprep.subr.bf16.mxu0 0
        %448 = vmatpush1.bf16.msra.mxu0 0
        %449 = vmatprep.subr.bf16.mxu0 0
        %450 = vmatpush1.bf16.msra.mxu0 0
        %451 = vmatprep.subr.bf16.mxu0 0
        %452 = vmatpush1.bf16.msra.mxu0 0
        %453 = vmatprep.subr.bf16.mxu0 0
        %454 = vmatpush1.bf16.msra.mxu0 0
        %455 = vmatprep.subr.bf16.mxu0 0
        %456 = vmatpush1.bf16.msra.mxu0 0
        %457 = vmatprep.mubr.bf16.mxu0 0
        %458 = vmatmul.mubr.bf16.gmra.mrb[0].mxu0 %v345
        %v459 = vpop.f32.mrb[0].mxu0
        %v460 = vadd.f32 %v279, %v459
        %v461 = vpop.f32.mrb[0].mxu0
        %v462 = vpop.f32.mrb[0].mxu0
        %v463 = vadd.f32 %v279, %v462
        %v464 = vpop.f32.mrb[0].mxu0
        %465 = vmatprep.mubr.bf16.mxu0 0
        %466 = vmatmul.mubr.bf16.gmra.mrb[0].mxu0 %v346
        %v467 = vpop.f32.mrb[0].mxu0
        %v468 = vadd.f32 %v279, %v467
        %v469 = vpop.f32.mrb[0].mxu0
        %v470 = vpop.f32.mrb[0].mxu0
        %v471 = vadd.f32 %v279, %v470
        %v472 = vpop.f32.mrb[0].mxu0
        %473 = vmatprep.mubr.bf16.mxu0 0
        %474 = vmatmul.mubr.bf16.gmra.mrb[0].mxu0 %v347
        %v475 = vpop.f32.mrb[0].mxu0
        %v476 = vadd.f32 %v279, %v475
        %v477 = vpop.f32.mrb[0].mxu0
        %v478 = vpop.f32.mrb[0].mxu0
        %v479 = vadd.f32 %v279, %v478
        %v480 = vpop.f32.mrb[0].mxu0
        %481 = vmatprep.mubr.bf16.mxu0 0
        %482 = vmatmul.mubr.bf16.gmra.mrb[0].mxu0 %v348
        %v483 = vpop.f32.mrb[0].mxu0
        %v484 = vadd.f32 %v279, %v483
        %v485 = vpop.f32.mrb[0].mxu0
        %v486 = vpop.f32.mrb[0].mxu0
        %v487 = vadd.f32 %v279, %v486
        %v488 = vpop.f32.mrb[0].mxu0
        %489 = vmatprep.mubr.bf16.mxu0 0
        %490 = vmatmul.mubr.bf16.gmra.mrb[0].mxu0 %v349
        %v491 = vpop.f32.mrb[0].mxu0
        %v492 = vadd.f32 %v279, %v491
        %v493 = vpop.f32.mrb[0].mxu0
        %v494 = vpop.f32.mrb[0].mxu0
        %v495 = vadd.f32 %v279, %v494
        %v496 = vpop.f32.mrb[0].mxu0
        %497 = vmatprep.mubr.bf16.mxu0 0
        %498 = vmatmul.mubr.bf16.gmra.mrb[0].mxu0 %v350
        %v499 = vpop.f32.mrb[0].mxu0
        %v500 = vadd.f32 %v279, %v499
        %v501 = vpop.f32.mrb[0].mxu0
        %v502 = vpop.f32.mrb[0].mxu0
        %v503 = vadd.f32 %v279, %v502
        %v504 = vpop.f32.mrb[0].mxu0
        %505 = vmatprep.mubr.bf16.mxu0 0
        %506 = vmatmul.mubr.bf16.gmra.mrb[0].mxu0 %v351
        %v507 = vpop.f32.mrb[0].mxu0
        %v508 = vadd.f32 %v279, %v507
        %v509 = vpop.f32.mrb[0].mxu0
        %v510 = vpop.f32.mrb[0].mxu0
        %v511 = vadd.f32 %v279, %v510
        %v512 = vpop.f32.mrb[0].mxu0
        %513 = vmatprep.mubr.bf16.mxu0 0
        %514 = vmatmul.mubr.bf16.gmra.mrb[0].mxu0 %v352
        %v515 = vpop.f32.mrb[0].mxu0
        %v516 = vadd.f32 %v279, %v515
        %v517 = vpop.f32.mrb[0].mxu0
        %v518 = vpop.f32.mrb[0].mxu0
        %v519 = vadd.f32 %v279, %v518
        %v520 = vpop.f32.mrb[0].mxu0
        %521 = vmatprep.mubr.bf16.mxu0 0
        %522 = vmatmul.mubr.bf16.gmra.mrb[0].mxu0 %v353
        %v523 = vpop.f32.mrb[0].mxu0
        %v524 = vadd.f32 %v279, %v523
        %v525 = vpop.f32.mrb[0].mxu0
        %v526 = vpop.f32.mrb[0].mxu0
        %v527 = vadd.f32 %v279, %v526
        %v528 = vpop.f32.mrb[0].mxu0
        %529 = vmatprep.mubr.bf16.mxu0 0
        %530 = vmatmul.mubr.bf16.gmra.mrb[0].mxu0 %v354
        %v531 = vpop.f32.mrb[0].mxu0
        %v532 = vadd.f32 %v279, %v531
        %v533 = vpop.f32.mrb[0].mxu0
        %v534 = vpop.f32.mrb[0].mxu0
        %v535 = vadd.f32 %v279, %v534
        %v536 = vpop.f32.mrb[0].mxu0
        %537 = vmatprep.mubr.bf16.mxu0 0
        %538 = vmatmul.mubr.bf16.gmra.mrb[0].mxu0 %v355
        %v539 = vpop.f32.mrb[0].mxu0
        %v540 = vadd.f32 %v279, %v539
        %v541 = vpop.f32.mrb[0].mxu0
        %v542 = vpop.f32.mrb[0].mxu0
        %v543 = vadd.f32 %v279, %v542
        %v544 = vpop.f32.mrb[0].mxu0
        %545 = vmatprep.mubr.bf16.mxu0 0
        %546 = vmatmul.mubr.bf16.gmra.mrb[0].mxu0 %v356
        %v547 = vpop.f32.mrb[0].mxu0
        %v548 = vadd.f32 %v279, %v547
        %v549 = vpop.f32.mrb[0].mxu0
        %v550 = vpop.f32.mrb[0].mxu0
        %v551 = vadd.f32 %v279, %v550
        %v552 = vpop.f32.mrb[0].mxu0
        %553 = vmatprep.mubr.bf16.mxu0 0
        %554 = vmatmul.mubr.bf16.gmra.mrb[0].mxu0 %v357
        %v555 = vpop.f32.mrb[0].mxu0
        %v556 = vadd.f32 %v279, %v555
        %v557 = vpop.f32.mrb[0].mxu0
        %v558 = vpop.f32.mrb[0].mxu0
        %v559 = vadd.f32 %v279, %v558
        %v560 = vpop.f32.mrb[0].mxu0
        %561 = vmatprep.mubr.bf16.mxu0 0
        %562 = vmatmul.mubr.bf16.gmra.mrb[0].mxu0 %v358
        %v563 = vpop.f32.mrb[0].mxu0
        %v564 = vadd.f32 %v279, %v563
        %v565 = vpop.f32.mrb[0].mxu0
        %v566 = vpop.f32.mrb[0].mxu0
        %v567 = vadd.f32 %v279, %v566
        %v568 = vpop.f32.mrb[0].mxu0
        %569 = vmatprep.mubr.bf16.mxu0 0
        %570 = vmatmul.mubr.bf16.gmra.mrb[0].mxu0 %v359
        %v571 = vpop.f32.mrb[0].mxu0
        %v572 = vadd.f32 %v279, %v571
        %v573 = vpop.f32.mrb[0].mxu0
        %v574 = vpop.f32.mrb[0].mxu0
        %v575 = vadd.f32 %v279, %v574
        %v576 = vpop.f32.mrb[0].mxu0
        %577 = vmatprep.mubr.bf16.mxu0 0
        %578 = vmatmul.mubr.bf16.gmra.mrb[0].mxu0 %v360
        %v579 = vpop.f32.mrb[0].mxu0
        %v580 = vadd.f32 %v279, %v579
        %v581 = vpop.f32.mrb[0].mxu0
        %v582 = vpop.f32.mrb[0].mxu0
        %v583 = vadd.f32 %v279, %v582
        %v584 = vpop.f32.mrb[0].mxu0
        %585 = vdwg.mxu0
        %v586 = vld [vmem:[#allocation7] sm:$0x1]
        %v587 = vadd.f32 %v460, %v463
        %v588 = vadd.f32 %v587, %v468
        %v589 = vadd.f32 %v588, %v471
        %v590 = vadd.f32 %v589, %v476
        %v591 = vadd.f32 %v590, %v479
        %v592 = vadd.f32 %v591, %v484
        %v593 = vadd.f32 %v592, %v487
        %v594 = vadd.f32 %v593, %v492
        %v595 = vadd.f32 %v594, %v495
        %v596 = vadd.f32 %v595, %v500
        %v597 = vadd.f32 %v596, %v503
        %v598 = vadd.f32 %v597, %v508
        %v599 = vadd.f32 %v598, %v511
        %v600 = vadd.f32 %v599, %v516
        %v601 = vadd.f32 %v600, %v519
        %v602 = vadd.f32 %v601, %v524
        %v603 = vadd.f32 %v602, %v527
        %v604 = vadd.f32 %v603, %v532
        %v605 = vadd.f32 %v604, %v535
        %v606 = vadd.f32 %v605, %v540
        %v607 = vadd.f32 %v606, %v543
        %v608 = vadd.f32 %v607, %v548
        %v609 = vadd.f32 %v608, %v551
        %v610 = vadd.f32 %v609, %v556
        %v611 = vadd.f32 %v610, %v559
        %v612 = vadd.f32 %v611, %v564
        %v613 = vadd.f32 %v612, %v567
        %v614 = vadd.f32 %v613, %v572
        %v615 = vadd.f32 %v614, %v575
        %v616 = vadd.f32 %v615, %v580
        %v617 = vadd.f32 %v616, %v583
        %v618 = vrot.slane %v617, 4
        %v619 = vadd.f32 %v617, %v618
        %v620 = vrot.slane %v619, 2
        %v621 = vadd.f32 %v619, %v620
        %v622 = vrot.slane %v621, 1
        %v623 = vadd.f32 %v621, %v622
        %v624 = vadd.f32 %v586, %v623
        %625 = vst [vmem:[#allocation7] sm:$0x1] %v624
        %v626 = vld [vmem:[#allocation8] sm:$0x1]
        %v627 = vmul.f32 %v460, %v460
        %v628 = vmul.f32 %v463, %v463
        %v629 = vmul.f32 %v468, %v468
        %v630 = vmul.f32 %v471, %v471
        %v631 = vmul.f32 %v476, %v476
        %v632 = vmul.f32 %v479, %v479
        %v633 = vmul.f32 %v484, %v484
        %v634 = vmul.f32 %v487, %v487
        %v635 = vmul.f32 %v492, %v492
        %v636 = vmul.f32 %v495, %v495
        %v637 = vmul.f32 %v500, %v500
        %v638 = vmul.f32 %v503, %v503
        %v639 = vmul.f32 %v508, %v508
        %v640 = vmul.f32 %v511, %v511
        %v641 = vmul.f32 %v516, %v516
        %v642 = vmul.f32 %v519, %v519
        %v643 = vmul.f32 %v524, %v524
        %v644 = vmul.f32 %v527, %v527
        %v645 = vmul.f32 %v532, %v532
        %v646 = vmul.f32 %v535, %v535
        %v647 = vmul.f32 %v540, %v540
        %v648 = vmul.f32 %v543, %v543
        %v649 = vmul.f32 %v548, %v548
        %v650 = vmul.f32 %v551, %v551
        %v651 = vmul.f32 %v556, %v556
        %v652 = vmul.f32 %v559, %v559
        %v653 = vmul.f32 %v564, %v564
        %v654 = vmul.f32 %v567, %v567
        %v655 = vmul.f32 %v572, %v572
        %v656 = vmul.f32 %v575, %v575
        %v657 = vmul.f32 %v580, %v580
        %v658 = vmul.f32 %v583, %v583
        %v659 = vadd.f32 %v627, %v628
        %v660 = vadd.f32 %v659, %v629
        %v661 = vadd.f32 %v660, %v630
        %v662 = vadd.f32 %v661, %v631
        %v663 = vadd.f32 %v662, %v632
        %v664 = vadd.f32 %v663, %v633
        %v665 = vadd.f32 %v664, %v634
        %v666 = vadd.f32 %v665, %v635
        %v667 = vadd.f32 %v666, %v636
        %v668 = vadd.f32 %v667, %v637
        %v669 = vadd.f32 %v668, %v638
        %v670 = vadd.f32 %v669, %v639
        %v671 = vadd.f32 %v670, %v640
        %v672 = vadd.f32 %v671, %v641
        %v673 = vadd.f32 %v672, %v642
        %v674 = vadd.f32 %v673, %v643
        %v675 = vadd.f32 %v674, %v644
        %v676 = vadd.f32 %v675, %v645
        %v677 = vadd.f32 %v676, %v646
        %v678 = vadd.f32 %v677, %v647
        %v679 = vadd.f32 %v678, %v648
        %v680 = vadd.f32 %v679, %v649
        %v681 = vadd.f32 %v680, %v650
        %v682 = vadd.f32 %v681, %v651
        %v683 = vadd.f32 %v682, %v652
        %v684 = vadd.f32 %v683, %v653
        %v685 = vadd.f32 %v684, %v654
        %v686 = vadd.f32 %v685, %v655
        %v687 = vadd.f32 %v686, %v656
        %v688 = vadd.f32 %v687, %v657
        %v689 = vadd.f32 %v688, %v658
        %v690 = vrot.slane %v689, 4
        %v691 = vadd.f32 %v689, %v690
        %v692 = vrot.slane %v691, 2
        %v693 = vadd.f32 %v691, %v692
        %v694 = vrot.slane %v693, 1
        %v695 = vadd.f32 %v693, %v694
        %v696 = vadd.f32 %v626, %v695
        %697 = vst [vmem:[#allocation8] sm:$0x1] %v696
        // Predicated region
        $region45: #{tpu_custom_call.1} parent=31 // pred_check
          %p698 = pneg %p103
        $region46: #{tpu_custom_call.1} parent=31 // pred_check_branch
          %700 = sbr.rel (%p698) target = $region48
        $region47: #{tpu_custom_call.1} parent=31 // pred_region
          %s702 = ssub.s32 16, 16
          %703 = vsyncadd [#allocation4], %s702
          %s705 = sshll.u32 [#allocation7], 4
          %s706 = int_to_ptr.vmem [resolvable:$true] %s705
          %708 = dma.vmem_to_hbm [thread:$0]  %s706, 16, %s3, [#allocation4]
        $region48: #{tpu_custom_call.1} parent=31 // pred_fallthru
          _
        // Predicated region
        $region49: #{tpu_custom_call.1} parent=31 // pred_check
          %p709 = pneg %p124
        $region50: #{tpu_custom_call.1} parent=31 // pred_check_branch
          %711 = sbr.rel (%p709) target = $region52
        $region51: #{tpu_custom_call.1} parent=31 // pred_region
          %s713 = ssub.s32 16, 16
          %714 = vsyncadd [#allocation9], %s713
          %s716 = sshll.u32 [#allocation8], 4
          %s717 = int_to_ptr.vmem [resolvable:$true] %s716
          %719 = dma.vmem_to_hbm [thread:$0]  %s717, 16, %s4, [#allocation9]
        $region52: #{tpu_custom_call.1} parent=31 // pred_fallthru
          _
        // Predicated region
        $region53: #{tpu_custom_call.1} parent=31 // pred_check
          %p720 = pneg %p103
        $region54: #{tpu_custom_call.1} parent=31 // pred_check_branch
          %722 = sbr.rel (%p720) target = $region56
        $region55: #{tpu_custom_call.1} parent=31 // pred_region
          %723 = dma.done [#allocation4], 16
        $region56: #{tpu_custom_call.1} parent=31 // pred_fallthru
          _
        // Predicated region
        $region57: #{tpu_custom_call.1} parent=31 // pred_check
          %p724 = pneg %p124
        $region58: #{tpu_custom_call.1} parent=31 // pred_check_branch
          %726 = sbr.rel (%p724) target = $region60
        $region59: #{tpu_custom_call.1} parent=31 // pred_region
          %727 = dma.done [#allocation9], 16
        $region60: #{tpu_custom_call.1} parent=31 // pred_fallthru
          _
      $region32: #{tpu_custom_call.1} parent=5 // pred_fallthru
        _
      %p728 = scmp.le.s32.totalorder 2, %s17
      // Predicated region
      $region61: #{tpu_custom_call.1} parent=5 // pred_check
        %p729 = pneg %p728
      $region62: #{tpu_custom_call.1} parent=5 // pred_check_branch
        %731 = sbr.rel (%p729) target = $region64
      $region63: #{tpu_custom_call.1} parent=5 // pred_region
        %s732 = ssub.s32 %s17, 2
      $region64: #{tpu_custom_call.1} parent=5 // pred_fallthru
        _
    $region6: #{tpu_custom_call.1} parent=1 // loop_footer
      %s21 = sadd.s32 1, %s17
    $region7: #{tpu_custom_call.1} parent=1 // loop_footer_branch
      %16 = sbr.rel target = $region3
    $region8: #{tpu_custom_call.1} parent=1 // loop_exit
      _
    %733 = vsyncpa [#allocation3], 1
    %s734 = scalar_lea.sflag [#allocation3], 1
    %735 = vsyncpa %s734, 1
    %736 = vsyncpa [#allocation6], 1
    %737 = vsyncpa [#allocation4], 1
    %s738 = scalar_lea.sflag [#allocation4], 1
    %739 = vsyncpa %s738, 1
    %740 = vsyncpa [#allocation9], 1

</llo_original>
